<compile_context>
chip_gen: v6e
topology: v6e:2x2x1
jax: 0.10.0
libtpu: 0.0.40
codegen_flags: <defaults>
</compile_context>

<pallas_src>
import functools

import jax
import jax.numpy as jnp
import numpy as np
from jax.experimental import pallas as pl
from jax.experimental.pallas import tpu as pltpu


# ----------------------------------------------------------------------------
# Fused IBP kernel. Ref layout:
#   [z0, (wq_i, b2_i) * n_hidden, wl_aug, c_t, ub, lb]
#   z0     : (bt, 2*IN)          = [x_U | x_L]
#   wq_i   : (2*H_in, 2*H_out)   = [[W+^T, W-^T], [W-^T, W+^T]]      (precomputed)
#   b2_i   : (1, 2*H_out)        = [b | b]
#   wl_aug : (O, H+1)            = [W_last | b_last]
#   c_t    : (S, bt, O)          = spec-major batched spec matrix block
#   ub/lb  : (S, bt)             = lane-dense (batch on lanes)
# ----------------------------------------------------------------------------
def _fused_ibp_kernel(*refs, n_hidden):
    z_ref = refs[0]
    hidden_refs = [(refs[1 + 2 * i], refs[2 + 2 * i]) for i in range(n_hidden)]
    wl_ref = refs[1 + 2 * n_hidden]
    c_ref = refs[2 + 2 * n_hidden]
    ub_ref = refs[3 + 2 * n_hidden]
    lb_ref = refs[4 + 2 * n_hidden]

    # ---- hidden IBP linear layers on the carried pair z = [hu | hl] ----
    z = z_ref[...].astype(jnp.float32)                                  # (bt, 2*H0)
    for li, (wq_ref, b_ref) in enumerate(hidden_refs):
        if li > 0:
            z = jnp.maximum(z, 0.0)                                     # ReLU on both halves
        z = jnp.dot(z, wq_ref[...].astype(jnp.float32),
                    preferred_element_type=jnp.float32) \
            + b_ref[...].astype(jnp.float32)                            # (bt, 2*H_out)
    if n_hidden > 0:
        z = jnp.maximum(z, 0.0)

    bt = z.shape[0]
    h = z.shape[1] // 2
    hu = z[:, :h]
    hl = z[:, h:]
    # Augment with a ones/zeros column so the folded C@b bias (last column of wc)
    # is picked up by ctr and ignored by dev.
    mid_aug = jnp.concatenate([(hu + hl) * 0.5,
                               jnp.ones((bt, 1), jnp.float32)], axis=1)   # (bt, h+1)
    diff_aug = jnp.concatenate([(hu - hl) * 0.5,
                                jnp.zeros((bt, 1), jnp.float32)], axis=1)  # (bt, h+1)

    # ---- final linear layer merged with the batched spec matrix C ----
    wl_aug = wl_ref[...].astype(jnp.float32)                            # (O, h+1)
    c = c_ref[...].astype(jnp.float32)                                  # (S, bt, O)
    s, _, o = c.shape
    # Single flattened MXU dot over all specs and the whole batch tile:
    #   wc[..., :h] = C @ W_last   ,   wc[..., h] = C @ b_last
    wc = jnp.dot(c.reshape(s * bt, o), wl_aug,
                 preferred_element_type=jnp.float32).reshape(s, bt, h + 1)

    ctr = jnp.sum(wc * mid_aug[None, :, :], axis=-1)                    # (S, bt)
    dev = jnp.sum(jnp.abs(wc) * diff_aug[None, :, :], axis=-1)          # (S, bt)

    ub_ref[...] = (ctr + dev).astype(ub_ref.dtype)
    lb_ref[...] = (ctr - dev).astype(lb_ref.dtype)


# ----------------------------------------------------------------------------
# ParallelBound equivalent: forward(x_U, x_L, eps, C) -> (ub, lb)
# ----------------------------------------------------------------------------
class ParallelBoundPallas:
    def __init__(self, params, batch_tile=256):
        # params: list of (W, b) tuples (PyTorch layout W: [out, in]);
        # ReLU between consecutive linear layers.
        self.params = [(jnp.asarray(W, jnp.float32), jnp.asarray(b, jnp.float32))
                       for W, b in params]
        self.batch_tile = batch_tile

        # Precompute quad weights so the kernel never transposes W, never
        # recomputes |W|, and never slices/concats along lanes per layer.
        self.hidden_pre = []
        for W, b in self.params[:-1]:
            wp_t = jnp.maximum(W, 0.0).T                      # (H_in, H_out)
            wn_t = jnp.minimum(W, 0.0).T                      # (H_in, H_out)
            wq = jnp.concatenate(
                [jnp.concatenate([wp_t, wn_t], axis=1),
                 jnp.concatenate([wn_t, wp_t], axis=1)], axis=0)  # (2*H_in, 2*H_out)
            b2 = jnp.concatenate([b, b]).reshape(1, -1)           # (1, 2*H_out)
            self.hidden_pre.append((wq, b2))

        Wl, bl = self.params[-1]
        self.wl_aug = jnp.concatenate([Wl, bl[:, None]], axis=1)  # (O, H+1)
        self.n_out = Wl.shape[0]

    def __call__(self, x_U, x_L, eps, C):
        del eps  # unused for the Linf IBP path (x_U / x_L already carry eps)
        B, IN = x_U.shape
        S = C.shape[1]
        O = self.n_out

        bt = B if (self.batch_tile is None or B <= self.batch_tile) else self.batch_tile
        assert B % bt == 0, "batch must be divisible by the batch tile (pad the batch)"
        grid = (B // bt,)

        # Pair the input bounds once in the wrapper; spec-major layout for C so the
        # kernel reads a contiguous (S, bt, O) block per batch tile.
        z0 = jnp.concatenate([x_U, x_L], axis=1).astype(jnp.float32)   # (B, 2*IN)
        c_t = jnp.transpose(C, (1, 0, 2)).astype(jnp.float32)          # (S, B, O)

        inputs = [z0]
        in_specs = [pl.BlockSpec((bt, 2 * IN), lambda i: (i, 0))]
        for wq, b2 in self.hidden_pre:
            inputs += [wq, b2]
            in_specs += [pl.BlockSpec(wq.shape, lambda i: (0, 0)),
                         pl.BlockSpec(b2.shape, lambda i: (0, 0))]
        inputs += [self.wl_aug, c_t]
        in_specs += [pl.BlockSpec(self.wl_aug.shape, lambda i: (0, 0)),
                     pl.BlockSpec((S, bt, O), lambda i: (0, i, 0))]

        # Lane-dense outputs: batch on lanes, transposed back to (B, S) outside.
        out_specs = (pl.BlockSpec((S, bt), lambda i: (0, i)),
                     pl.BlockSpec((S, bt), lambda i: (0, i)))
        out_shape = (jax.ShapeDtypeStruct((S, B), jnp.float32),
                     jax.ShapeDtypeStruct((S, B), jnp.float32))

        kernel = functools.partial(_fused_ibp_kernel, n_hidden=len(self.hidden_pre))
        ub_t, lb_t = pl.pallas_call(
            kernel,
            out_shape=out_shape,
            grid=grid,
            in_specs=in_specs,
            out_specs=out_specs,
            compiler_params=pltpu.CompilerParams(
                dimension_semantics=("parallel",)),
        )(*inputs)
        return jnp.transpose(ub_t), jnp.transpose(lb_t)


# Plain-JAX reference (for numerical verification only).
def ibp_reference(x_U, x_L, params, C):
    hU, hL = x_U, x_L
    n = len(params)
    for i, (W, b) in enumerate(params):
        if i > 0:
            hU = jnp.maximum(hU, 0.0)
            hL = jnp.maximum(hL, 0.0)
        mid = (hU + hL) * 0.5
        diff = (hU - hL) * 0.5
        if i == n - 1:
            Wc = jnp.einsum('bso,oh->bsh', C, W)
            bc = jnp.einsum('bso,o->bs', C, b)
            ctr = jnp.einsum('bsh,bh->bs', Wc, mid) + bc
            dv = jnp.einsum('bsh,bh->bs', jnp.abs(Wc), diff)
            return ctr + dv, ctr - dv
        ctr = mid @ W.T + b
        dv = diff @ jnp.abs(W).T
        hU, hL = ctr + dv, ctr - dv


if __name__ == "__main__":
    # Small, deterministic setup.
    B, IN, HID, OUT, NSPEC = 2, 32, 64, 10, 9
    key = jax.random.PRNGKey(0)
    k = jax.random.split(key, 8)

    def init_linear(kw, kb, fan_in, fan_out):
        bound = 1.0 / np.sqrt(fan_in)
        W = jax.random.uniform(kw, (fan_out, fan_in), jnp.float32, -bound, bound)
        b = jax.random.uniform(kb, (fan_out,), jnp.float32, -bound, bound)
        return W, b

    params = [
        init_linear(k[0], k[1], IN, HID),
        init_linear(k[2], k[3], HID, HID),
        init_linear(k[4], k[5], HID, OUT),
    ]

    x = jax.random.normal(k[6], (B, IN), jnp.float32)
    eps = jnp.float32(0.1)
    x_U = x + eps
    x_L = x - eps

    # Spec matrix C: margin between the true class and every other class.
    labels = np.array([3, 7])
    C_np = np.zeros((B, NSPEC, OUT), dtype=np.float32)
    for bi in range(B):
        others = [c for c in range(OUT) if c != labels[bi]]
        for j, o in enumerate(others):
            C_np[bi, j, labels[bi]] = 1.0
            C_np[bi, j, o] = -1.0
    C = jnp.asarray(C_np)

    bound_module = ParallelBoundPallas(params)
    ub, lb = bound_module(x_U, x_L, eps, C)
    jax.block_until_ready((ub, lb))

    ub_ref, lb_ref = ibp_reference(x_U, x_L, [(W, b) for W, b in bound_module.params], C)
    np.testing.assert_allclose(np.asarray(ub), np.asarray(ub_ref), rtol=1e-4, atol=1e-4)
    np.testing.assert_allclose(np.asarray(lb), np.asarray(lb_ref), rtol=1e-4, atol=1e-4)

    print("KERNEL_OK")
</pallas_src>

<mosaic_0001>
module attributes {stable_mosaic.version = 11 : i64} {
  func.func @_fused_ibp_kernel(%arg0: i32, %arg1: memref<2x64xf32, #tpu.memory_space<vmem>>, %arg2: memref<64x128xf32, #tpu.memory_space<vmem>>, %arg3: memref<1x128xf32, #tpu.memory_space<vmem>>, %arg4: memref<128x128xf32, #tpu.memory_space<vmem>>, %arg5: memref<1x128xf32, #tpu.memory_space<vmem>>, %arg6: memref<10x65xf32, #tpu.memory_space<vmem>>, %arg7: memref<9x2x10xf32, #tpu.memory_space<vmem>>, %arg8: memref<9x2xf32, #tpu.memory_space<vmem>>, %arg9: memref<9x2xf32, #tpu.memory_space<vmem>>) attributes {dimension_semantics = [#tpu.dimension_semantics<parallel>], iteration_bounds = array<i64: 1>, scalar_prefetch = 0 : i64, scratch_operands = 0 : i64, tpu.core_type = #tpu.core_type<tc>, window_params = [{transform_indices = @transform_0, window_bounds = array<i64: 2, 64>}, {pipeline_mode = #tpu.pipeline_mode<synchronous>, transform_indices = @transform_1, window_bounds = array<i64: 64, 128>}, {pipeline_mode = #tpu.pipeline_mode<synchronous>, transform_indices = @transform_2, window_bounds = array<i64: 1, 128>}, {pipeline_mode = #tpu.pipeline_mode<synchronous>, transform_indices = @transform_3, window_bounds = array<i64: 128, 128>}, {pipeline_mode = #tpu.pipeline_mode<synchronous>, transform_indices = @transform_4, window_bounds = array<i64: 1, 128>}, {pipeline_mode = #tpu.pipeline_mode<synchronous>, transform_indices = @transform_5, window_bounds = array<i64: 10, 65>}, {transform_indices = @transform_6, window_bounds = array<i64: 9, 2, 10>}, {transform_indices = @transform_7, window_bounds = array<i64: 9, 2>}, {transform_indices = @transform_8, window_bounds = array<i64: 9, 2>}]} {
    %c0 = arith.constant 0 : index
    %c0_0 = arith.constant 0 : index
    %0 = vector.load %arg1[%c0, %c0_0] : memref<2x64xf32, #tpu.memory_space<vmem>>, vector<2x64xf32>
    %c0_1 = arith.constant 0 : index
    %c0_2 = arith.constant 0 : index
    %1 = vector.load %arg2[%c0_1, %c0_2] : memref<64x128xf32, #tpu.memory_space<vmem>>, vector<64x128xf32>
    %cst = arith.constant dense<0.000000e+00> : vector<2x128xf32>
    %2 = tpu.matmul %0, %1, %cst {dimension_numbers = #tpu.dot_dimension_numbers<[1], [0], [0], [1], [0, 0, 1, 1], [], []>} : vector<2x64xf32>, vector<64x128xf32>, vector<2x128xf32> -> vector<2x128xf32>
    %c0_3 = arith.constant 0 : index
    %c0_4 = arith.constant 0 : index
    %3 = vector.load %arg3[%c0_3, %c0_4] : memref<1x128xf32, #tpu.memory_space<vmem>>, vector<1x128xf32>
    %4 = vector.broadcast %3 : vector<1x128xf32> to vector<2x128xf32>
    %5 = arith.addf %2, %4 : vector<2x128xf32>
    %cst_5 = arith.constant 0.000000e+00 : f32
    %6 = vector.broadcast %cst_5 : f32 to vector<2x128xf32>
    %7 = arith.maximumf %5, %6 : vector<2x128xf32>
    %c0_6 = arith.constant 0 : index
    %c0_7 = arith.constant 0 : index
    %8 = vector.load %arg4[%c0_6, %c0_7] : memref<128x128xf32, #tpu.memory_space<vmem>>, vector<128x128xf32>
    %cst_8 = arith.constant dense<0.000000e+00> : vector<2x128xf32>
    %9 = tpu.matmul %7, %8, %cst_8 {dimension_numbers = #tpu.dot_dimension_numbers<[1], [0], [0], [1], [0, 0, 1, 1], [], []>} : vector<2x128xf32>, vector<128x128xf32>, vector<2x128xf32> -> vector<2x128xf32>
    %c0_9 = arith.constant 0 : index
    %c0_10 = arith.constant 0 : index
    %10 = vector.load %arg5[%c0_9, %c0_10] : memref<1x128xf32, #tpu.memory_space<vmem>>, vector<1x128xf32>
    %11 = vector.broadcast %10 : vector<1x128xf32> to vector<2x128xf32>
    %12 = arith.addf %9, %11 : vector<2x128xf32>
    %cst_11 = arith.constant 0.000000e+00 : f32
    %13 = vector.broadcast %cst_11 : f32 to vector<2x128xf32>
    %14 = arith.maximumf %12, %13 : vector<2x128xf32>
    %15 = vector.extract_strided_slice %14 {offsets = [0, 0], sizes = [2, 64], strides = [1, 1]} : vector<2x128xf32> to vector<2x64xf32>
    %16 = vector.extract_strided_slice %14 {offsets = [0, 64], sizes = [2, 64], strides = [1, 1]} : vector<2x128xf32> to vector<2x64xf32>
    %17 = arith.addf %15, %16 : vector<2x64xf32>
    %cst_12 = arith.constant 5.000000e-01 : f32
    %18 = vector.broadcast %cst_12 : f32 to vector<2x64xf32>
    %19 = arith.mulf %17, %18 : vector<2x64xf32>
    %cst_13 = arith.constant 1.000000e+00 : f32
    %20 = vector.broadcast %cst_13 : f32 to vector<2x1xf32>
    %21 = tpu.concatenate %19, %20 in 1 : vector<2x64xf32>, vector<2x1xf32> -> vector<2x65xf32>
    %22 = arith.subf %15, %16 : vector<2x64xf32>
    %cst_14 = arith.constant 5.000000e-01 : f32
    %23 = vector.broadcast %cst_14 : f32 to vector<2x64xf32>
    %24 = arith.mulf %22, %23 : vector<2x64xf32>
    %cst_15 = arith.constant 0.000000e+00 : f32
    %25 = vector.broadcast %cst_15 : f32 to vector<2x1xf32>
    %26 = tpu.concatenate %24, %25 in 1 : vector<2x64xf32>, vector<2x1xf32> -> vector<2x65xf32>
    %c0_16 = arith.constant 0 : index
    %c0_17 = arith.constant 0 : index
    %27 = vector.load %arg6[%c0_16, %c0_17] : memref<10x65xf32, #tpu.memory_space<vmem>>, vector<10x65xf32>
    %c0_18 = arith.constant 0 : index
    %c0_19 = arith.constant 0 : index
    %c0_20 = arith.constant 0 : index
    %28 = vector.load %arg7[%c0_18, %c0_19, %c0_20] : memref<9x2x10xf32, #tpu.memory_space<vmem>>, vector<9x2x10xf32>
    %29 = vector.shape_cast %28 : vector<9x2x10xf32> to vector<18x10xf32>
    %cst_21 = arith.constant dense<0.000000e+00> : vector<18x65xf32>
    %30 = tpu.matmul %29, %27, %cst_21 {dimension_numbers = #tpu.dot_dimension_numbers<[1], [0], [0], [1], [0, 0, 1, 1], [], []>} : vector<18x10xf32>, vector<10x65xf32>, vector<18x65xf32> -> vector<18x65xf32>
    %31 = vector.shape_cast %30 : vector<18x65xf32> to vector<9x2x65xf32>
    %32 = vector.shape_cast %21 : vector<2x65xf32> to vector<1x2x65xf32>
    %33 = vector.broadcast %32 : vector<1x2x65xf32> to vector<9x2x65xf32>
    %34 = arith.mulf %31, %33 : vector<9x2x65xf32>
    %cst_22 = arith.constant dense<0.000000e+00> : vector<9x2xf32>
    %35 = vector.multi_reduction <add>, %34, %cst_22 [2] : vector<9x2x65xf32> to vector<9x2xf32>
    %36 = math.absf %31 : vector<9x2x65xf32>
    %37 = vector.shape_cast %26 : vector<2x65xf32> to vector<1x2x65xf32>
    %38 = vector.broadcast %37 : vector<1x2x65xf32> to vector<9x2x65xf32>
    %39 = arith.mulf %36, %38 : vector<9x2x65xf32>
    %cst_23 = arith.constant dense<0.000000e+00> : vector<9x2xf32>
    %40 = vector.multi_reduction <add>, %39, %cst_23 [2] : vector<9x2x65xf32> to vector<9x2xf32>
    %41 = arith.addf %35, %40 : vector<9x2xf32>
    %c0_24 = arith.constant 0 : index
    %c0_25 = arith.constant 0 : index
    %42 = vector.load %arg8[%c0_24, %c0_25] : memref<9x2xf32, #tpu.memory_space<vmem>>, vector<9x2xf32>
    tpu.vector_store %arg8[%c0_24, %c0_25], %41 {strides = array<i32>} : memref<9x2xf32, #tpu.memory_space<vmem>>, vector<9x2xf32>,
    %43 = arith.subf %35, %40 : vector<9x2xf32>
    %c0_26 = arith.constant 0 : index
    %c0_27 = arith.constant 0 : index
    %44 = vector.load %arg9[%c0_26, %c0_27] : memref<9x2xf32, #tpu.memory_space<vmem>>, vector<9x2xf32>
    tpu.vector_store %arg9[%c0_26, %c0_27], %43 {strides = array<i32>} : memref<9x2xf32, #tpu.memory_space<vmem>>, vector<9x2xf32>,
    return
  }
  func.func @transform_0(%arg0: i32) -> (i32, i32) {
    %c0_i32 = arith.constant 0 : i32
    %c0_i32_0 = arith.constant 0 : i32
    return %arg0, %c0_i32 : i32, i32
  }
  func.func @transform_1(%arg0: i32) -> (i32, i32) {
    %c0_i32 = arith.constant 0 : i32
    %c0_i32_0 = arith.constant 0 : i32
    %c0_i32_1 = arith.constant 0 : i32
    return %c0_i32, %c0_i32_0 : i32, i32
  }
  func.func @transform_2(%arg0: i32) -> (i32, i32) {
    %c0_i32 = arith.constant 0 : i32
    %c0_i32_0 = arith.constant 0 : i32
    %c0_i32_1 = arith.constant 0 : i32
    return %c0_i32, %c0_i32_0 : i32, i32
  }
  func.func @transform_3(%arg0: i32) -> (i32, i32) {
    %c0_i32 = arith.constant 0 : i32
    %c0_i32_0 = arith.constant 0 : i32
    %c0_i32_1 = arith.constant 0 : i32
    return %c0_i32, %c0_i32_0 : i32, i32
  }
  func.func @transform_4(%arg0: i32) -> (i32, i32) {
    %c0_i32 = arith.constant 0 : i32
    %c0_i32_0 = arith.constant 0 : i32
    %c0_i32_1 = arith.constant 0 : i32
    return %c0_i32, %c0_i32_0 : i32, i32
  }
  func.func @transform_5(%arg0: i32) -> (i32, i32) {
    %c0_i32 = arith.constant 0 : i32
    %c0_i32_0 = arith.constant 0 : i32
    %c0_i32_1 = arith.constant 0 : i32
    return %c0_i32, %c0_i32_0 : i32, i32
  }
  func.func @transform_6(%arg0: i32) -> (i32, i32, i32) {
    %c0_i32 = arith.constant 0 : i32
    %c0_i32_0 = arith.constant 0 : i32
    %c0_i32_1 = arith.constant 0 : i32
    return %c0_i32, %arg0, %c0_i32_0 : i32, i32, i32
  }
  func.func @transform_7(%arg0: i32) -> (i32, i32) {
    %c0_i32 = arith.constant 0 : i32
    %c0_i32_0 = arith.constant 0 : i32
    return %c0_i32, %arg0 : i32, i32
  }
  func.func @transform_8(%arg0: i32) -> (i32, i32) {
    %c0_i32 = arith.constant 0 : i32
    %c0_i32_0 = arith.constant 0 : i32
    return %c0_i32, %arg0 : i32, i32
  }
}

</mosaic_0001>

<llo_original>
// kernel: tpu_custom_call.1
$region0: #{tpu_custom_call.1}
  #allocation0 [shape = 'u32[]', space=smem, size = 0x4, offset = 0x4, fixed_abs, tag = 'smem constant byte address 0x4 - core index']
  #allocation1 [shape = 'u32[144,128]{1,0:T(1,128)}', space=vmem, size = 0x12000, scoped, tag = 'internal scratch']
  %s0 = inlined_call_operand.hbm [shape: f32[2,64], index: 0, kind: input, shape index: {}]
  %s1 = inlined_call_operand.hbm [shape: f32[64,128], index: 1, kind: input, shape index: {}]
  %s2 = inlined_call_operand.vmem [shape: f32[1,128], index: 2, kind: input, shape index: {}]
  %s3 = inlined_call_operand.hbm [shape: f32[128,128], index: 3, kind: input, shape index: {}]
  %s4 = inlined_call_operand.vmem [shape: f32[1,128], index: 4, kind: input, shape index: {}]
  %s5 = inlined_call_operand.hbm [shape: f32[10,65], index: 5, kind: input, shape index: {}]
  %s6 = inlined_call_operand.hbm [shape: f32[9,2,10], index: 6, kind: input, shape index: {}]
  %s7 = inlined_call_operand.vmem [shape: f32[9,2], index: 7, kind: output, shape index: {0}]
  %s8 = inlined_call_operand.vmem [shape: f32[9,2], index: 8, kind: output, shape index: {1}]
  %9 = xla_tuple %s7, %s8
  %s10 = sld [smem:[#allocation0]]
  $region66: #{tpu_custom_call.1} parent=0
    _
  %s12 = ssub.s32 1, %s10
  %s13 = scalar_select 0, %s12, %s10
  $region1: #{tpu_custom_call.1} parent=0
    #allocation2 [shape = 'u8[1024]{0}', space=vmem, size = 0x400, scoped, tag = 'input window, operand 0, single buffered']
    #allocation3 [shape = 's32[1]{0}', space=sflag, size = 0x4, scoped, tag = 'scoped memory for tpu_custom_call.1']
    #allocation4 [shape = 'u8[32768]{0}', space=vmem, size = 0x8000, scoped, tag = 'input window, operand 1, single buffered']
    #allocation5 [shape = 's32[1]{0}', space=sflag, size = 0x4, scoped, tag = 'scoped memory for tpu_custom_call.1']
    #allocation6 [shape = 'u8[65536]{0}', space=vmem, size = 0x10000, scoped, tag = 'input window, operand 3, single buffered']
    #allocation7 [shape = 'u8[8192]{0}', space=vmem, size = 0x2000, scoped, tag = 'input window, operand 5, single buffered']
    #allocation8 [shape = 's32[1]{0}', space=sflag, size = 0x4, scoped, tag = 'scoped memory for tpu_custom_call.1']
    #allocation9 [shape = 'u8[9216]{0}', space=vmem, size = 0x2400, scoped, tag = 'input window, operand 6, single buffered']
    %14 = vsyncpa [#allocation3], 0
    %15 = vsyncpa [#allocation5], 0
    %16 = vsyncpa [#allocation8], 0
    // Predicated region
    $region2: #{tpu_custom_call.1} parent=1 // pred_check
      _
    $region3: #{tpu_custom_call.1} parent=1 // pred_check_branch
      %18 = sbr.rel (0) target = $region5
    $region4: #{tpu_custom_call.1} parent=1 // pred_region
      %s20 = ssub.s32 32, 32
      %21 = vsyncadd [#allocation3], %s20
      %s23 = sshll.u32 [#allocation2], 4
      %s24 = int_to_ptr.vmem [resolvable:$true] %s23
      %26 = dma.hbm_to_vmem [thread:$0]  %s0, 32, %s24, [#allocation3]
    $region5: #{tpu_custom_call.1} parent=1 // pred_fallthru
      _
    // Predicated region
    $region6: #{tpu_custom_call.1} parent=1 // pred_check
      _
    $region7: #{tpu_custom_call.1} parent=1 // pred_check_branch
      %28 = sbr.rel (0) target = $region9
    $region8: #{tpu_custom_call.1} parent=1 // pred_region
      %s30 = ssub.s32 1024, 1024
      %31 = vsyncadd [#allocation5], %s30
      %s32 = sshll.u32 [#allocation4], 4
      %s33 = int_to_ptr.vmem [resolvable:$true] %s32
      %38 = dma.hbm_to_vmem [thread:$0]  %s1, 1024, %s33, [#allocation5], 128, 128, 8
    $region9: #{tpu_custom_call.1} parent=1 // pred_fallthru
      _
    // Predicated region
    $region10: #{tpu_custom_call.1} parent=1 // pred_check
      _
    $region11: #{tpu_custom_call.1} parent=1 // pred_check_branch
      %40 = sbr.rel (0) target = $region13
    $region12: #{tpu_custom_call.1} parent=1 // pred_region
      _
    $region13: #{tpu_custom_call.1} parent=1 // pred_fallthru
      _
    // Predicated region
    $region14: #{tpu_custom_call.1} parent=1 // pred_check
      _
    $region15: #{tpu_custom_call.1} parent=1 // pred_check_branch
      %42 = sbr.rel (0) target = $region17
    $region16: #{tpu_custom_call.1} parent=1 // pred_region
      %s44 = ssub.s32 2048, 2048
      %45 = vsyncadd [#allocation5], %s44
      %s46 = sshll.u32 [#allocation6], 4
      %s47 = int_to_ptr.vmem [resolvable:$true] %s46
      %52 = dma.hbm_to_vmem [thread:$0]  %s3, 2048, %s47, [#allocation5], 128, 128, 8
    $region17: #{tpu_custom_call.1} parent=1 // pred_fallthru
      _
    // Predicated region
    $region18: #{tpu_custom_call.1} parent=1 // pred_check
      _
    $region19: #{tpu_custom_call.1} parent=1 // pred_check_branch
      %54 = sbr.rel (0) target = $region21
    $region20: #{tpu_custom_call.1} parent=1 // pred_region
      _
    $region21: #{tpu_custom_call.1} parent=1 // pred_fallthru
      _
    // Predicated region
    $region22: #{tpu_custom_call.1} parent=1 // pred_check
      _
    $region23: #{tpu_custom_call.1} parent=1 // pred_check_branch
      %56 = sbr.rel (0) target = $region25
    $region24: #{tpu_custom_call.1} parent=1 // pred_region
      %s58 = ssub.s32 256, 256
      %59 = vsyncadd [#allocation8], %s58
      %s60 = sshll.u32 [#allocation7], 4
      %s61 = int_to_ptr.vmem [resolvable:$true] %s60
      %66 = dma.hbm_to_vmem [thread:$0]  %s5, 256, %s61, [#allocation8], 128, 128, 8
    $region25: #{tpu_custom_call.1} parent=1 // pred_fallthru
      _
    // Predicated region
    $region26: #{tpu_custom_call.1} parent=1 // pred_check
      _
    $region27: #{tpu_custom_call.1} parent=1 // pred_check_branch
      %68 = sbr.rel (0) target = $region29
    $region28: #{tpu_custom_call.1} parent=1 // pred_region
      %s70 = ssub.s32 288, 288
      %71 = vsyncadd [#allocation8], %s70
      %s72 = sshll.u32 [#allocation9], 4
      %s73 = int_to_ptr.vmem [resolvable:$true] %s72
      %78 = dma.hbm_to_vmem [thread:$0]  %s6, 288, %s73, [#allocation8], 32, 32, 2
    $region29: #{tpu_custom_call.1} parent=1 // pred_fallthru
      _
    // Predicated region
    $region30: #{tpu_custom_call.1} parent=1 // pred_check
      _
    $region31: #{tpu_custom_call.1} parent=1 // pred_check_branch
      %80 = sbr.rel (0) target = $region33
    $region32: #{tpu_custom_call.1} parent=1 // pred_region
      %81 = dma.done [#allocation3], 32
    $region33: #{tpu_custom_call.1} parent=1 // pred_fallthru
      _
    // Predicated region
    $region34: #{tpu_custom_call.1} parent=1 // pred_check
      _
    $region35: #{tpu_custom_call.1} parent=1 // pred_check_branch
      %83 = sbr.rel (0) target = $region37
    $region36: #{tpu_custom_call.1} parent=1 // pred_region
      %84 = dma.done [#allocation5], 1024
    $region37: #{tpu_custom_call.1} parent=1 // pred_fallthru
      _
    // Predicated region
    $region38: #{tpu_custom_call.1} parent=1 // pred_check
      _
    $region39: #{tpu_custom_call.1} parent=1 // pred_check_branch
      %86 = sbr.rel (0) target = $region41
    $region40: #{tpu_custom_call.1} parent=1 // pred_region
      %87 = dma.done [#allocation5], 2048
    $region41: #{tpu_custom_call.1} parent=1 // pred_fallthru
      _
    // Predicated region
    $region42: #{tpu_custom_call.1} parent=1 // pred_check
      _
    $region43: #{tpu_custom_call.1} parent=1 // pred_check_branch
      %89 = sbr.rel (0) target = $region45
    $region44: #{tpu_custom_call.1} parent=1 // pred_region
      %90 = dma.done [#allocation8], 256
    $region45: #{tpu_custom_call.1} parent=1 // pred_fallthru
      _
    // Predicated region
    $region46: #{tpu_custom_call.1} parent=1 // pred_check
      _
    $region47: #{tpu_custom_call.1} parent=1 // pred_check_branch
      %92 = sbr.rel (0) target = $region49
    $region48: #{tpu_custom_call.1} parent=1 // pred_region
      %93 = dma.done [#allocation8], 288
    $region49: #{tpu_custom_call.1} parent=1 // pred_fallthru
      _
    %v94 = vld [vmem:[#allocation2] sm:$0x3]
    %v95 = vld [vmem:[#allocation4] sm:$0xff]
    %v96 = vld [vmem:[#allocation4 + $0x8] sm:$0xff]
    %v97 = vld [vmem:[#allocation4 + $0x10] sm:$0xff]
    %v98 = vld [vmem:[#allocation4 + $0x18] sm:$0xff]
    %v99 = vld [vmem:[#allocation4 + $0x20] sm:$0xff]
    %v100 = vld [vmem:[#allocation4 + $0x28] sm:$0xff]
    %v101 = vld [vmem:[#allocation4 + $0x30] sm:$0xff]
    %v102 = vld [vmem:[#allocation4 + $0x38] sm:$0xff]
    %v103 = vld [vmem:[%s2] sm:$0x1]
    %v105 = vlaneseq
    %v106 = vshrl.u32 %v105, 7
    %v107 = vsub.s32 0, %v106
    %v108 = vrot.slane %v103, %v107
    %vm110 = vcmask 523264
    %v112 = vsel %vm110, %v94, 0
    %114 = vmatprep.subr.mxu0 0.0
    %115 = vmatpush1.msra.mxu0 0.0
    %116 = vmatprep.subr.mxu0 0.0
    %117 = vmatpush1.msra.mxu0 0.0
    %118 = vmatprep.subr.mxu0 0.0
    %119 = vmatpush1.msra.mxu0 0.0
    %120 = vmatprep.subr.mxu0 0.0
    %121 = vmatpush1.msra.mxu0 0.0
    %122 = vmatprep.subr.mxu0 0.0
    %123 = vmatpush1.msra.mxu0 0.0
    %124 = vmatprep.subr.mxu0 0.0
    %125 = vmatpush1.msra.mxu0 0.0
    %126 = vmatprep.subr.mxu0 0.0
    %127 = vmatpush1.msra.mxu0 0.0
    %128 = vmatprep.subr.mxu0 0.0
    %129 = vmatpush1.msra.mxu0 0.0
    %130 = vmatprep.subr.mxu0 0.0
    %131 = vmatpush1.msra.mxu0 %v102
    %132 = vmatprep.subr.mxu0 0.0
    %133 = vmatpush1.msra.mxu0 %v101
    %134 = vmatprep.subr.mxu0 0.0
    %135 = vmatpush1.msra.mxu0 %v100
    %136 = vmatprep.subr.mxu0 0.0
    %137 = vmatpush1.msra.mxu0 %v99
    %138 = vmatprep.subr.mxu0 0.0
    %139 = vmatpush1.msra.mxu0 %v98
    %140 = vmatprep.subr.mxu0 0.0
    %141 = vmatpush1.msra.mxu0 %v97
    %142 = vmatprep.subr.mxu0 0.0
    %143 = vmatpush1.msra.mxu0 %v96
    %144 = vmatprep.subr.mxu0 0.0
    %145 = vmatpush1.msra.mxu0 %v95
    %146 = vmatprep.subr.mxu0 0.0
    %147 = vmatpush2.msra.mxu0 0.0
    %148 = vmatprep.subr.mxu0 0.0
    %149 = vmatpush2.msra.mxu0 0.0
    %150 = vmatprep.subr.mxu0 0.0
    %151 = vmatpush2.msra.mxu0 0.0
    %152 = vmatprep.subr.mxu0 0.0
    %153 = vmatpush2.msra.mxu0 0.0
    %154 = vmatprep.subr.mxu0 0.0
    %155 = vmatpush2.msra.mxu0 0.0
    %156 = vmatprep.subr.mxu0 0.0
    %157 = vmatpush2.msra.mxu0 0.0
    %158 = vmatprep.subr.mxu0 0.0
    %159 = vmatpush2.msra.mxu0 0.0
    %160 = vmatprep.subr.mxu0 0.0
    %161 = vmatpush2.msra.mxu0 0.0
    %162 = vmatprep.subr.mxu0 0.0
    %163 = vmatpush2.msra.mxu0 0.0
    %164 = vmatprep.subr.mxu0 0.0
    %165 = vmatpush2.msra.mxu0 0.0
    %166 = vmatprep.subr.mxu0 0.0
    %167 = vmatpush2.msra.mxu0 0.0
    %168 = vmatprep.subr.mxu0 0.0
    %169 = vmatpush2.msra.mxu0 0.0
    %170 = vmatprep.subr.mxu0 0.0
    %171 = vmatpush2.msra.mxu0 0.0
    %172 = vmatprep.subr.mxu0 0.0
    %173 = vmatpush2.msra.mxu0 0.0
    %174 = vmatprep.subr.mxu0 0.0
    %175 = vmatpush2.msra.mxu0 0.0
    %176 = vmatprep.subr.mxu0 0.0
    %177 = vmatpush2.msra.mxu0 0.0
    %178 = vmatprep.mubr.f32.mxu0 0.0
    %179 = vmatmul.mubr.f32.gmra.mxu0 %v112
    %v180 = vpop.f32.mrf.mxu0
    %v181 = vadd.f32 %v108, %v180
    %v182 = vpop.f32.mrf.mxu0
    %183 = vdwg.mxu0
    %v184 = vmax.f32 %v181, 0.0
    %v185 = vld [vmem:[#allocation6] sm:$0xff]
    %v186 = vld [vmem:[#allocation6 + $0x8] sm:$0xff]
    %v187 = vld [vmem:[#allocation6 + $0x10] sm:$0xff]
    %v188 = vld [vmem:[#allocation6 + $0x18] sm:$0xff]
    %v189 = vld [vmem:[#allocation6 + $0x20] sm:$0xff]
    %v190 = vld [vmem:[#allocation6 + $0x28] sm:$0xff]
    %v191 = vld [vmem:[#allocation6 + $0x30] sm:$0xff]
    %v192 = vld [vmem:[#allocation6 + $0x38] sm:$0xff]
    %v193 = vld [vmem:[#allocation6 + $0x40] sm:$0xff]
    %v194 = vld [vmem:[#allocation6 + $0x48] sm:$0xff]
    %v195 = vld [vmem:[#allocation6 + $0x50] sm:$0xff]
    %v196 = vld [vmem:[#allocation6 + $0x58] sm:$0xff]
    %v197 = vld [vmem:[#allocation6 + $0x60] sm:$0xff]
    %v198 = vld [vmem:[#allocation6 + $0x68] sm:$0xff]
    %v199 = vld [vmem:[#allocation6 + $0x70] sm:$0xff]
    %v200 = vld [vmem:[#allocation6 + $0x78] sm:$0xff]
    %v201 = vld [vmem:[%s4] sm:$0x1]
    %v203 = vlaneseq
    %v204 = vshrl.u32 %v203, 7
    %v205 = vsub.s32 0, %v204
    %v206 = vrot.slane %v201, %v205
    %208 = vmatprep.subr.mxu0 0.0
    %209 = vmatpush1.msra.mxu0 %v200
    %210 = vmatprep.subr.mxu0 0.0
    %211 = vmatpush1.msra.mxu0 %v199
    %212 = vmatprep.subr.mxu0 0.0
    %213 = vmatpush1.msra.mxu0 %v198
    %214 = vmatprep.subr.mxu0 0.0
    %215 = vmatpush1.msra.mxu0 %v197
    %216 = vmatprep.subr.mxu0 0.0
    %217 = vmatpush1.msra.mxu0 %v196
    %218 = vmatprep.subr.mxu0 0.0
    %219 = vmatpush1.msra.mxu0 %v195
    %220 = vmatprep.subr.mxu0 0.0
    %221 = vmatpush1.msra.mxu0 %v194
    %222 = vmatprep.subr.mxu0 0.0
    %223 = vmatpush1.msra.mxu0 %v193
    %224 = vmatprep.subr.mxu0 0.0
    %225 = vmatpush1.msra.mxu0 %v192
    %226 = vmatprep.subr.mxu0 0.0
    %227 = vmatpush1.msra.mxu0 %v191
    %228 = vmatprep.subr.mxu0 0.0
    %229 = vmatpush1.msra.mxu0 %v190
    %230 = vmatprep.subr.mxu0 0.0
    %231 = vmatpush1.msra.mxu0 %v189
    %232 = vmatprep.subr.mxu0 0.0
    %233 = vmatpush1.msra.mxu0 %v188
    %234 = vmatprep.subr.mxu0 0.0
    %235 = vmatpush1.msra.mxu0 %v187
    %236 = vmatprep.subr.mxu0 0.0
    %237 = vmatpush1.msra.mxu0 %v186
    %238 = vmatprep.subr.mxu0 0.0
    %239 = vmatpush1.msra.mxu0 %v185
    %240 = vmatprep.subr.mxu0 0.0
    %241 = vmatpush2.msra.mxu0 0.0
    %242 = vmatprep.subr.mxu0 0.0
    %243 = vmatpush2.msra.mxu0 0.0
    %244 = vmatprep.subr.mxu0 0.0
    %245 = vmatpush2.msra.mxu0 0.0
    %246 = vmatprep.subr.mxu0 0.0
    %247 = vmatpush2.msra.mxu0 0.0
    %248 = vmatprep.subr.mxu0 0.0
    %249 = vmatpush2.msra.mxu0 0.0
    %250 = vmatprep.subr.mxu0 0.0
    %251 = vmatpush2.msra.mxu0 0.0
    %252 = vmatprep.subr.mxu0 0.0
    %253 = vmatpush2.msra.mxu0 0.0
    %254 = vmatprep.subr.mxu0 0.0
    %255 = vmatpush2.msra.mxu0 0.0
    %256 = vmatprep.subr.mxu0 0.0
    %257 = vmatpush2.msra.mxu0 0.0
    %258 = vmatprep.subr.mxu0 0.0
    %259 = vmatpush2.msra.mxu0 0.0
    %260 = vmatprep.subr.mxu0 0.0
    %261 = vmatpush2.msra.mxu0 0.0
    %262 = vmatprep.subr.mxu0 0.0
    %263 = vmatpush2.msra.mxu0 0.0
    %264 = vmatprep.subr.mxu0 0.0
    %265 = vmatpush2.msra.mxu0 0.0
    %266 = vmatprep.subr.mxu0 0.0
    %267 = vmatpush2.msra.mxu0 0.0
    %268 = vmatprep.subr.mxu0 0.0
    %269 = vmatpush2.msra.mxu0 0.0
    %270 = vmatprep.subr.mxu0 0.0
    %271 = vmatpush2.msra.mxu0 0.0
    %272 = vmatprep.mubr.f32.mxu0 0.0
    %273 = vmatmul.mubr.f32.gmra.mxu0 %v184
    %v274 = vpop.f32.mrf.mxu0
    %v275 = vadd.f32 %v206, %v274
    %v276 = vpop.f32.mrf.mxu0
    %277 = vdwg.mxu0
    %v278 = vmax.f32 %v275, 0.0
    %280 = vrot.lane.b32.xlu0 %v278, 64
    %v281 = vpop.permute.xlu0 %280
    %v283 = vadd.f32 %v278, %v281
    %v284 = vmul.f32 %v283, 0.5
    %v285 = vsel %vm110, %v284, 1.0
    %v286 = vsub.f32 %v278, %v281
    %v287 = vmul.f32 %v286, 0.5
    %v288 = vsel %vm110, %v287, 0.0
    %v289 = vld [vmem:[#allocation7] sm:$0xff]
    %v290 = vld [vmem:[#allocation7 + $0x8] sm:$0x3]
    %v291 = vld [vmem:[#allocation9] sm:$0x3]
    %v292 = vld [vmem:[#allocation9 + $0x2] sm:$0x3]
    %v293 = vld [vmem:[#allocation9 + $0x4] sm:$0x3]
    %v294 = vld [vmem:[#allocation9 + $0x6] sm:$0x3]
    %v295 = vld [vmem:[#allocation9 + $0x8] sm:$0x3]
    %v296 = vld [vmem:[#allocation9 + $0xa] sm:$0x3]
    %v297 = vld [vmem:[#allocation9 + $0xc] sm:$0x3]
    %v298 = vld [vmem:[#allocation9 + $0xe] sm:$0x3]
    %v299 = vld [vmem:[#allocation9 + $0x10] sm:$0x3]
    %v309 = vcombine.low %v291, %v292
    %v310 = vcombine.low %v293, %v294
    %v312 = vunpack.c.l.s4 1983009808
    %v313 = vunpack.c.0.s8 %v312
    %v314 = vlaneseq
    %v315 = vshrl.u32 %v314, 7
    %v316 = vsub.s32 %v313, %v315
    %v317 = vrot.slane %v309, %v316
    %v319 = vunpack.c.l.s4 1983009808
    %v320 = vunpack.c.0.s8 %v319
    %v321 = vlaneseq
    %v322 = vshrl.u32 %v321, 7
    %v323 = vsub.s32 %v320, %v322
    %v324 = vrot.slane %v310, %v323
    %v325 = vcombine.low %v317, %v324
    %v326 = vcombine.low %v295, %v296
    %v327 = vcombine.low %v297, %v298
    %v329 = vunpack.c.l.s4 1983009808
    %v330 = vunpack.c.0.s8 %v329
    %v331 = vlaneseq
    %v332 = vshrl.u32 %v331, 7
    %v333 = vsub.s32 %v330, %v332
    %v334 = vrot.slane %v326, %v333
    %v336 = vunpack.c.l.s4 1983009808
    %v337 = vunpack.c.0.s8 %v336
    %v338 = vlaneseq
    %v339 = vshrl.u32 %v338, 7
    %v340 = vsub.s32 %v337, %v339
    %v341 = vrot.slane %v327, %v340
    %v342 = vcombine.low %v334, %v341
    %v344 = vunpack.c.l.s4 1983009808
    %v345 = vunpack.c.0.s8 %v344
    %v346 = vlaneseq
    %v347 = vshrl.u32 %v346, 7
    %v348 = vsub.s32 %v345, %v347
    %v349 = vrot.slane %v299, %v348
    %vm350 = vcmask 80896
    %v351 = vsel %vm350, %v325, 0
    %v353 = vsel %vm350, %v342, 0
    %v355 = vsel %vm350, %v349, 0
    %vm357 = vcmask 1041408
    %v359 = vsel %vm357, %v290, 0
    %361 = vmatprep.subr.mxu0 0.0
    %362 = vmatpush1.msra.mxu0 0.0
    %363 = vmatprep.subr.mxu0 0.0
    %364 = vmatpush1.msra.mxu0 0.0
    %365 = vmatprep.subr.mxu0 0.0
    %366 = vmatpush1.msra.mxu0 0.0
    %367 = vmatprep.subr.mxu0 0.0
    %368 = vmatpush1.msra.mxu0 0.0
    %369 = vmatprep.subr.mxu0 0.0
    %370 = vmatpush1.msra.mxu0 0.0
    %371 = vmatprep.subr.mxu0 0.0
    %372 = vmatpush1.msra.mxu0 0.0
    %373 = vmatprep.subr.mxu0 0.0
    %374 = vmatpush1.msra.mxu0 0.0
    %375 = vmatprep.subr.mxu0 0.0
    %376 = vmatpush1.msra.mxu0 0.0
    %377 = vmatprep.subr.mxu0 0.0
    %378 = vmatpush1.msra.mxu0 0.0
    %379 = vmatprep.subr.mxu0 0.0
    %380 = vmatpush1.msra.mxu0 0.0
    %381 = vmatprep.subr.mxu0 0.0
    %382 = vmatpush1.msra.mxu0 0.0
    %383 = vmatprep.subr.mxu0 0.0
    %384 = vmatpush1.msra.mxu0 0.0
    %385 = vmatprep.subr.mxu0 0.0
    %386 = vmatpush1.msra.mxu0 0.0
    %387 = vmatprep.subr.mxu0 0.0
    %388 = vmatpush1.msra.mxu0 0.0
    %389 = vmatprep.subr.mxu0 0.0
    %390 = vmatpush1.msra.mxu0 %v359
    %391 = vmatprep.subr.mxu0 0.0
    %392 = vmatpush1.msra.mxu0 %v289
    %393 = vmatprep.subr.mxu0 0.0
    %394 = vmatpush2.msra.mxu0 0.0
    %395 = vmatprep.subr.mxu0 0.0
    %396 = vmatpush2.msra.mxu0 0.0
    %397 = vmatprep.subr.mxu0 0.0
    %398 = vmatpush2.msra.mxu0 0.0
    %399 = vmatprep.subr.mxu0 0.0
    %400 = vmatpush2.msra.mxu0 0.0
    %401 = vmatprep.subr.mxu0 0.0
    %402 = vmatpush2.msra.mxu0 0.0
    %403 = vmatprep.subr.mxu0 0.0
    %404 = vmatpush2.msra.mxu0 0.0
    %405 = vmatprep.subr.mxu0 0.0
    %406 = vmatpush2.msra.mxu0 0.0
    %407 = vmatprep.subr.mxu0 0.0
    %408 = vmatpush2.msra.mxu0 0.0
    %409 = vmatprep.subr.mxu0 0.0
    %410 = vmatpush2.msra.mxu0 0.0
    %411 = vmatprep.subr.mxu0 0.0
    %412 = vmatpush2.msra.mxu0 0.0
    %413 = vmatprep.subr.mxu0 0.0
    %414 = vmatpush2.msra.mxu0 0.0
    %415 = vmatprep.subr.mxu0 0.0
    %416 = vmatpush2.msra.mxu0 0.0
    %417 = vmatprep.subr.mxu0 0.0
    %418 = vmatpush2.msra.mxu0 0.0
    %419 = vmatprep.subr.mxu0 0.0
    %420 = vmatpush2.msra.mxu0 0.0
    %421 = vmatprep.subr.mxu0 0.0
    %422 = vmatpush2.msra.mxu0 0.0
    %423 = vmatprep.subr.mxu0 0.0
    %424 = vmatpush2.msra.mxu0 0.0
    %425 = vmatprep.mubr.f32.mxu0 0.0
    %426 = vmatmul.mubr.f32.gmra.mxu0 %v351
    %v427 = vpop.f32.mrf.mxu0
    %v428 = vadd.f32 0.0, %v427
    %v429 = vpop.f32.mrf.mxu0
    %430 = vmatprep.mubr.f32.mxu0 0.0
    %431 = vmatmul.mubr.f32.gmra.mxu0 %v353
    %v432 = vpop.f32.mrf.mxu0
    %v433 = vadd.f32 0.0, %v432
    %v434 = vpop.f32.mrf.mxu0
    %435 = vmatprep.mubr.f32.mxu0 0.0
    %436 = vmatmul.mubr.f32.gmra.mxu0 %v355
    %v437 = vpop.f32.mrf.mxu0
    %v438 = vadd.f32 0.0, %v437
    %v439 = vpop.f32.mrf.mxu0
    %440 = vdwg.mxu0
    %v444 = vcombine.high %v428, %v428
    %v446 = vunpack.c.l.s4 1983009808
    %v447 = vunpack.c.0.s8 %v446
    %v448 = vlaneseq
    %v449 = vshrl.u32 %v448, 7
    %v450 = vsub.s32 %v447, %v449
    %v451 = vrot.slane %v428, %v450
    %v453 = vunpack.c.l.s4 1983009808
    %v454 = vunpack.c.0.s8 %v453
    %v455 = vlaneseq
    %v456 = vshrl.u32 %v455, 7
    %v457 = vsub.s32 %v454, %v456
    %v458 = vrot.slane %v444, %v457
    %v459 = vcombine.high %v451, %v451
    %v460 = vcombine.high %v458, %v458
    %v461 = vcombine.high %v433, %v433
    %v463 = vunpack.c.l.s4 1983009808
    %v464 = vunpack.c.0.s8 %v463
    %v465 = vlaneseq
    %v466 = vshrl.u32 %v465, 7
    %v467 = vsub.s32 %v464, %v466
    %v468 = vrot.slane %v433, %v467
    %v470 = vunpack.c.l.s4 1983009808
    %v471 = vunpack.c.0.s8 %v470
    %v472 = vlaneseq
    %v473 = vshrl.u32 %v472, 7
    %v474 = vsub.s32 %v471, %v473
    %v475 = vrot.slane %v461, %v474
    %v476 = vcombine.high %v468, %v468
    %v477 = vcombine.high %v475, %v475
    %v479 = vunpack.c.l.s4 1983009808
    %v480 = vunpack.c.0.s8 %v479
    %v481 = vlaneseq
    %v482 = vshrl.u32 %v481, 7
    %v483 = vsub.s32 %v480, %v482
    %v484 = vrot.slane %v438, %v483
    %v494 = vmul.f32 %v451, %v285
    %v495 = vmul.f32 %v459, %v285
    %v496 = vmul.f32 %v458, %v285
    %v497 = vmul.f32 %v460, %v285
    %v498 = vmul.f32 %v468, %v285
    %v499 = vmul.f32 %v476, %v285
    %v500 = vmul.f32 %v475, %v285
    %v501 = vmul.f32 %v477, %v285
    %v502 = vmul.f32 %v484, %v285
    %vm503 = vcmask 525312
    %v504 = vsel %vm503, %v494, 0.0
    %505 = vadd.xlane.f32.xlu0 %v504
    %v506 = vpop.xlane.xlu0 %505
    %v507 = vsel %vm503, %v495, 0.0
    %508 = vadd.xlane.f32.xlu0 %v507
    %v509 = vpop.xlane.xlu0 %508
    %v510 = vsel %vm503, %v496, 0.0
    %511 = vadd.xlane.f32.xlu0 %v510
    %v512 = vpop.xlane.xlu0 %511
    %v513 = vsel %vm503, %v497, 0.0
    %514 = vadd.xlane.f32.xlu0 %v513
    %v515 = vpop.xlane.xlu0 %514
    %v516 = vsel %vm503, %v498, 0.0
    %517 = vadd.xlane.f32.xlu0 %v516
    %v518 = vpop.xlane.xlu0 %517
    %v519 = vsel %vm503, %v499, 0.0
    %520 = vadd.xlane.f32.xlu0 %v519
    %v521 = vpop.xlane.xlu0 %520
    %v522 = vsel %vm503, %v500, 0.0
    %523 = vadd.xlane.f32.xlu0 %v522
    %v524 = vpop.xlane.xlu0 %523
    %v525 = vsel %vm503, %v501, 0.0
    %526 = vadd.xlane.f32.xlu0 %v525
    %v527 = vpop.xlane.xlu0 %526
    %v528 = vsel %vm503, %v502, 0.0
    %529 = vadd.xlane.f32.xlu0 %v528
    %v530 = vpop.xlane.xlu0 %529
    %v531 = vand.u32 2147483647, %v451
    %v532 = vand.u32 2147483647, %v459
    %v533 = vand.u32 2147483647, %v458
    %v534 = vand.u32 2147483647, %v460
    %v535 = vand.u32 2147483647, %v468
    %v536 = vand.u32 2147483647, %v476
    %v537 = vand.u32 2147483647, %v475
    %v538 = vand.u32 2147483647, %v477
    %v539 = vand.u32 2147483647, %v484
    %v540 = vmul.f32 %v531, %v288
    %v541 = vmul.f32 %v532, %v288
    %v542 = vmul.f32 %v533, %v288
    %v543 = vmul.f32 %v534, %v288
    %v544 = vmul.f32 %v535, %v288
    %v545 = vmul.f32 %v536, %v288
    %v546 = vmul.f32 %v537, %v288
    %v547 = vmul.f32 %v538, %v288
    %v548 = vmul.f32 %v539, %v288
    %v549 = vsel %vm503, %v540, 0.0
    %550 = vadd.xlane.f32.xlu0 %v549
    %v551 = vpop.xlane.xlu0 %550
    %v552 = vsel %vm503, %v541, 0.0
    %553 = vadd.xlane.f32.xlu0 %v552
    %v554 = vpop.xlane.xlu0 %553
    %v555 = vsel %vm503, %v542, 0.0
    %556 = vadd.xlane.f32.xlu0 %v555
    %v557 = vpop.xlane.xlu0 %556
    %v558 = vsel %vm503, %v543, 0.0
    %559 = vadd.xlane.f32.xlu0 %v558
    %v560 = vpop.xlane.xlu0 %559
    %v561 = vsel %vm503, %v544, 0.0
    %562 = vadd.xlane.f32.xlu0 %v561
    %v563 = vpop.xlane.xlu0 %562
    %v564 = vsel %vm503, %v545, 0.0
    %565 = vadd.xlane.f32.xlu0 %v564
    %v566 = vpop.xlane.xlu0 %565
    %v567 = vsel %vm503, %v546, 0.0
    %568 = vadd.xlane.f32.xlu0 %v567
    %v569 = vpop.xlane.xlu0 %568
    %v570 = vsel %vm503, %v547, 0.0
    %571 = vadd.xlane.f32.xlu0 %v570
    %v572 = vpop.xlane.xlu0 %571
    %v573 = vsel %vm503, %v548, 0.0
    %574 = vadd.xlane.f32.xlu0 %v573
    %v575 = vpop.xlane.xlu0 %574
    %v576 = vadd.f32 %v506, %v551
    %v577 = vadd.f32 %v509, %v554
    %v578 = vadd.f32 %v512, %v557
    %v579 = vadd.f32 %v515, %v560
    %v580 = vadd.f32 %v518, %v563
    %v581 = vadd.f32 %v521, %v566
    %v582 = vadd.f32 %v524, %v569
    %v583 = vadd.f32 %v527, %v572
    %v584 = vadd.f32 %v530, %v575
    %v594 = vlaneseq
    %v595 = vand.u32 %v594, 127
    %v596 = vlaneseq
    %v597 = vshrl.u32 %v596, 7
    %v598 = vsub.s32 %v595, %v597
    %v599 = vrot.slane %v576, %v598
    %v600 = vlaneseq
    %v601 = vshrl.u32 %v600, 7
    %v602 = vsub.s32 %v595, %v601
    %v603 = vrot.slane %v577, %v602
    %v604 = vlaneseq
    %v605 = vshrl.u32 %v604, 7
    %v606 = vsub.s32 %v595, %v605
    %v607 = vrot.slane %v578, %v606
    %v608 = vlaneseq
    %v609 = vshrl.u32 %v608, 7
    %v610 = vsub.s32 %v595, %v609
    %v611 = vrot.slane %v579, %v610
    %v612 = vlaneseq
    %v613 = vshrl.u32 %v612, 7
    %v614 = vsub.s32 %v595, %v613
    %v615 = vrot.slane %v580, %v614
    %v616 = vlaneseq
    %v617 = vshrl.u32 %v616, 7
    %v618 = vsub.s32 %v595, %v617
    %v619 = vrot.slane %v581, %v618
    %v620 = vlaneseq
    %v621 = vshrl.u32 %v620, 7
    %v622 = vsub.s32 %v595, %v621
    %v623 = vrot.slane %v582, %v622
    %v624 = vlaneseq
    %v625 = vshrl.u32 %v624, 7
    %v626 = vsub.s32 %v595, %v625
    %v627 = vrot.slane %v583, %v626
    %v628 = vlaneseq
    %v629 = vshrl.u32 %v628, 7
    %v630 = vsub.s32 %v595, %v629
    %v631 = vrot.slane %v584, %v630
    %vm632 = vcmask 1041409
    %v633 = vsel %vm632, %v603, %v599
    %vm634 = vcmask 1042434
    %v635 = vsel %vm634, %v607, %v633
    %vm636 = vcmask 1043459
    %v637 = vsel %vm636, %v611, %v635
    %vm638 = vcmask 1044484
    %v639 = vsel %vm638, %v615, %v637
    %vm640 = vcmask 1045509
    %v641 = vsel %vm640, %v619, %v639
    %vm642 = vcmask 1046534
    %v643 = vsel %vm642, %v623, %v641
    %vm644 = vcmask 1047559
    %v645 = vsel %vm644, %v627, %v643
    %vm648 = vcmask 15360
    %649 = vst.msk [vmem:[%s7] sm:$0xff] %vm648, %v645
    %vm650 = vcmask 8192
    %651 = vst.msk [vmem:[%s7 + $0x8] sm:$0x1] %vm650, %v631
    %v652 = vsub.f32 %v506, %v551
    %v653 = vsub.f32 %v509, %v554
    %v654 = vsub.f32 %v512, %v557
    %v655 = vsub.f32 %v515, %v560
    %v656 = vsub.f32 %v518, %v563
    %v657 = vsub.f32 %v521, %v566
    %v658 = vsub.f32 %v524, %v569
    %v659 = vsub.f32 %v527, %v572
    %v660 = vsub.f32 %v530, %v575
    %v670 = vlaneseq
    %v671 = vshrl.u32 %v670, 7
    %v672 = vsub.s32 %v595, %v671
    %v673 = vrot.slane %v652, %v672
    %v674 = vlaneseq
    %v675 = vshrl.u32 %v674, 7
    %v676 = vsub.s32 %v595, %v675
    %v677 = vrot.slane %v653, %v676
    %v678 = vlaneseq
    %v679 = vshrl.u32 %v678, 7
    %v680 = vsub.s32 %v595, %v679
    %v681 = vrot.slane %v654, %v680
    %v682 = vlaneseq
    %v683 = vshrl.u32 %v682, 7
    %v684 = vsub.s32 %v595, %v683
    %v685 = vrot.slane %v655, %v684
    %v686 = vlaneseq
    %v687 = vshrl.u32 %v686, 7
    %v688 = vsub.s32 %v595, %v687
    %v689 = vrot.slane %v656, %v688
    %v690 = vlaneseq
    %v691 = vshrl.u32 %v690, 7
    %v692 = vsub.s32 %v595, %v691
    %v693 = vrot.slane %v657, %v692
    %v694 = vlaneseq
    %v695 = vshrl.u32 %v694, 7
    %v696 = vsub.s32 %v595, %v695
    %v697 = vrot.slane %v658, %v696
    %v698 = vlaneseq
    %v699 = vshrl.u32 %v698, 7
    %v700 = vsub.s32 %v595, %v699
    %v701 = vrot.slane %v659, %v700
    %v702 = vlaneseq
    %v703 = vshrl.u32 %v702, 7
    %v704 = vsub.s32 %v595, %v703
    %v705 = vrot.slane %v660, %v704
    %v706 = vsel %vm632, %v677, %v673
    %v707 = vsel %vm634, %v681, %v706
    %v708 = vsel %vm636, %v685, %v707
    %v709 = vsel %vm638, %v689, %v708
    %v710 = vsel %vm640, %v693, %v709
    %v711 = vsel %vm642, %v697, %v710
    %v712 = vsel %vm644, %v701, %v711
    %715 = vst.msk [vmem:[%s8] sm:$0xff] %vm648, %v712
    %716 = vst.msk [vmem:[%s8 + $0x8] sm:$0x1] %vm650, %v705
    // Predicated region
    $region50: #{tpu_custom_call.1} parent=1 // pred_check
      _
    $region51: #{tpu_custom_call.1} parent=1 // pred_check_branch
      %718 = sbr.rel (0) target = $region53
    $region52: #{tpu_custom_call.1} parent=1 // pred_region
      _
    $region53: #{tpu_custom_call.1} parent=1 // pred_fallthru
      _
    // Predicated region
    $region54: #{tpu_custom_call.1} parent=1 // pred_check
      _
    $region55: #{tpu_custom_call.1} parent=1 // pred_check_branch
      %720 = sbr.rel (0) target = $region57
    $region56: #{tpu_custom_call.1} parent=1 // pred_region
      _
    $region57: #{tpu_custom_call.1} parent=1 // pred_fallthru
      _
    // Predicated region
    $region58: #{tpu_custom_call.1} parent=1 // pred_check
      _
    $region59: #{tpu_custom_call.1} parent=1 // pred_check_branch
      %722 = sbr.rel (0) target = $region61
    $region60: #{tpu_custom_call.1} parent=1 // pred_region
      _
    $region61: #{tpu_custom_call.1} parent=1 // pred_fallthru
      _
    // Predicated region
    $region62: #{tpu_custom_call.1} parent=1 // pred_check
      _
    $region63: #{tpu_custom_call.1} parent=1 // pred_check_branch
      %724 = sbr.rel (0) target = $region65
    $region64: #{tpu_custom_call.1} parent=1 // pred_region
      _
    $region65: #{tpu_custom_call.1} parent=1 // pred_fallthru
      _
    %725 = vsyncpa [#allocation3], 1
    %726 = vsyncpa [#allocation5], 1
    %727 = vsyncpa [#allocation8], 1

</llo_original>
